<compile_context>
chip_gen: v7x
topology: tpu7x:2x2x1
jax: 0.10.0
libtpu: 0.0.40
codegen_flags: <defaults>
</compile_context>

<pallas_src>
import jax
import jax.numpy as jnp
import numpy as np
from jax.experimental import pallas as pl
from jax.experimental.pallas import tpu as pltpu

B = 2            # batch
T = 8            # src_time_steps
ENC_HID = 32     # enc_hid_dim
ARG_DIM = 32     # arg_dim
NEG_INF = -1e30  # finite stand-in for -inf (f32-safe)


def sentiment_attention_kernel(enc_ref, args_ref, mask_ref, w_ref, b_ref, out_ref):
    f32 = jnp.float32
    enc = enc_ref[...]             # (B, T, D)
    args = args_ref[...]           # (B, 2A)  = [arg1 | arg2]
    mask = mask_ref[...]           # (B, T)   1.0 == masked (padding) position
    Bq, Tq, D = enc.shape
    A = args.shape[-1] // 2

    # ---- single packed projection for both heads (hoisted, one MXU matmul) ----
    proj = jnp.tanh(
        jnp.dot(enc.reshape(Bq * Tq, D), w_ref[...],
                preferred_element_type=f32) + b_ref[...]
    ).reshape(Bq, Tq, 2 * A)                             # (B, T, 2A)

    p1 = proj[:, :, :A]
    p2 = proj[:, :, A:]
    a1 = args[:, :A]
    a2 = args[:, A:]

    # ---- attention scores (lane-dim multiply-reduce) ----
    s1 = jnp.sum(p1 * a1[:, None, :], axis=-1)           # (B, T)
    s2 = jnp.sum(p2 * a2[:, None, :], axis=-1)           # (B, T)

    def masked_softmax(scores):
        scores = jnp.where(mask > 0.5, NEG_INF, scores)
        m = jnp.max(scores, axis=-1, keepdims=True)
        e = jnp.exp(scores - m)
        # NOTE: a fully-masked row yields a uniform distribution here instead of
        # the NaNs PyTorch would produce with a true -inf fill; benign for valid
        # inputs (every sequence has at least one unmasked token).
        return e / jnp.sum(e, axis=-1, keepdims=True)

    w1 = masked_softmax(s1)                               # (B, T)
    w2 = masked_softmax(s2)                               # (B, T)

    # ---- context vectors (sublane reduce over T) ----
    ctx1 = jnp.sum(w1[:, :, None] * enc, axis=1)          # (B, D)
    ctx2 = jnp.sum(w2[:, :, None] * enc, axis=1)          # (B, D)

    # single lane-dense output slab
    out_ref[...] = jnp.concatenate([ctx1, ctx2], axis=-1)  # (B, 2D)


def init_params(key):
    """Synthetic parameters; linear weights stored as (in_features, out_features)."""
    k1, k2, k3, k4 = jax.random.split(key, 4)
    w1 = jax.random.normal(k1, (ENC_HID, ARG_DIM), jnp.float32) * 0.1
    w2 = jax.random.normal(k2, (ENC_HID, ARG_DIM), jnp.float32) * 0.1
    b1 = jax.random.normal(k3, (ARG_DIM,), jnp.float32) * 0.1
    b2 = jax.random.normal(k4, (ARG_DIM,), jnp.float32) * 0.1
    return w1, b1, w2, b2


def sentiment_attention_forward(params, arg1, arg2, enc_hs, src_mask):
    w1, b1, w2, b2 = params
    # host-side packing -> few, lane-dense DMAs into the kernel
    w_pack = jnp.concatenate([w1, w2], axis=1)                 # (D, 2A)
    b_pack = jnp.concatenate([b1, b2], axis=0)[None, :]        # (1, 2A)
    args_pack = jnp.concatenate([arg1, arg2], axis=-1)         # (B, 2A)

    vmem = pl.BlockSpec(memory_space=pltpu.MemorySpace.VMEM)
    out = pl.pallas_call(
        sentiment_attention_kernel,
        out_shape=jax.ShapeDtypeStruct((B, 2 * ENC_HID), jnp.float32),
        in_specs=[vmem] * 5,
        out_specs=vmem,
    )(enc_hs, args_pack, src_mask.astype(jnp.float32), w_pack, b_pack)
    return out   # == torch.cat((ctx1, ctx2), -1)


def _reference(params, arg1, arg2, enc_hs, src_mask):
    """Pure-JAX reference mirroring the PyTorch forward."""
    w1, b1, w2, b2 = params

    def head(w, b, arg):
        proj = jnp.tanh(enc_hs @ w + b)                        # (B, T, A)
        s = jnp.einsum("bta,ba->bt", proj, arg)
        s = jnp.where(src_mask > 0.5, NEG_INF, s)
        a = jax.nn.softmax(s, axis=-1)
        return jnp.einsum("bt,btd->bd", a, enc_hs)

    return jnp.concatenate([head(w1, b1, arg1), head(w2, b2, arg2)], axis=-1)


if __name__ == "__main__":
    key = jax.random.PRNGKey(0)
    k_par, k_a1, k_a2, k_enc = jax.random.split(key, 4)

    params = init_params(k_par)
    arg1 = jax.random.normal(k_a1, (B, ARG_DIM), jnp.float32)
    arg2 = jax.random.normal(k_a2, (B, ARG_DIM), jnp.float32)
    enc_hs = jax.random.normal(k_enc, (B, T, ENC_HID), jnp.float32)
    # src_mask: 1.0 == masked (padding) position
    src_mask = jnp.zeros((B, T), jnp.float32)
    src_mask = src_mask.at[0, 6:].set(1.0).at[1, 5:].set(1.0)

    out = sentiment_attention_forward(params, arg1, arg2, enc_hs, src_mask)
    jax.block_until_ready(out)

    ref = _reference(params, arg1, arg2, enc_hs, src_mask)
    np.testing.assert_allclose(np.asarray(out), np.asarray(ref), rtol=1e-3, atol=1e-3)

    print("KERNEL_OK")
</pallas_src>

<mosaic_0001>
module attributes {stable_mosaic.version = 11 : i64} {
  func.func @sentiment_attention_kernel(%arg0: memref<2x8x32xf32, #tpu.memory_space<vmem>>, %arg1: memref<2x64xf32, #tpu.memory_space<vmem>>, %arg2: memref<2x8xf32, #tpu.memory_space<vmem>>, %arg3: memref<32x64xf32, #tpu.memory_space<vmem>>, %arg4: memref<1x64xf32, #tpu.memory_space<vmem>>, %arg5: memref<2x64xf32, #tpu.memory_space<vmem>>) attributes {dimension_semantics = [], scalar_prefetch = 0 : i64, scratch_operands = 0 : i64, tpu.core_type = #tpu.core_type<tc>} {
    %c0 = arith.constant 0 : index
    %c0_0 = arith.constant 0 : index
    %c0_1 = arith.constant 0 : index
    %0 = vector.load %arg0[%c0, %c0_0, %c0_1] : memref<2x8x32xf32, #tpu.memory_space<vmem>>, vector<2x8x32xf32>
    %c0_2 = arith.constant 0 : index
    %c0_3 = arith.constant 0 : index
    %1 = vector.load %arg1[%c0_2, %c0_3] : memref<2x64xf32, #tpu.memory_space<vmem>>, vector<2x64xf32>
    %c0_4 = arith.constant 0 : index
    %c0_5 = arith.constant 0 : index
    %2 = vector.load %arg2[%c0_4, %c0_5] : memref<2x8xf32, #tpu.memory_space<vmem>>, vector<2x8xf32>
    %3 = vector.shape_cast %0 : vector<2x8x32xf32> to vector<16x32xf32>
    %c0_6 = arith.constant 0 : index
    %c0_7 = arith.constant 0 : index
    %4 = vector.load %arg3[%c0_6, %c0_7] : memref<32x64xf32, #tpu.memory_space<vmem>>, vector<32x64xf32>
    %cst = arith.constant dense<0.000000e+00> : vector<16x64xf32>
    %5 = tpu.matmul %3, %4, %cst {dimension_numbers = #tpu.dot_dimension_numbers<[1], [0], [0], [1], [0, 0, 1, 1], [], []>} : vector<16x32xf32>, vector<32x64xf32>, vector<16x64xf32> -> vector<16x64xf32>
    %c0_8 = arith.constant 0 : index
    %c0_9 = arith.constant 0 : index
    %6 = vector.load %arg4[%c0_8, %c0_9] : memref<1x64xf32, #tpu.memory_space<vmem>>, vector<1x64xf32>
    %7 = vector.broadcast %6 : vector<1x64xf32> to vector<16x64xf32>
    %8 = arith.addf %5, %7 : vector<16x64xf32>
    %9 = math.tanh %8 : vector<16x64xf32>
    %10 = vector.shape_cast %9 : vector<16x64xf32> to vector<2x8x64xf32>
    %11 = vector.extract_strided_slice %10 {offsets = [0, 0, 0], sizes = [2, 8, 32], strides = [1, 1, 1]} : vector<2x8x64xf32> to vector<2x8x32xf32>
    %12 = vector.extract_strided_slice %10 {offsets = [0, 0, 32], sizes = [2, 8, 32], strides = [1, 1, 1]} : vector<2x8x64xf32> to vector<2x8x32xf32>
    %13 = vector.extract_strided_slice %1 {offsets = [0, 0], sizes = [2, 32], strides = [1, 1]} : vector<2x64xf32> to vector<2x32xf32>
    %14 = vector.extract_strided_slice %1 {offsets = [0, 32], sizes = [2, 32], strides = [1, 1]} : vector<2x64xf32> to vector<2x32xf32>
    %15 = vector.shape_cast %13 : vector<2x32xf32> to vector<2x1x32xf32>
    %16 = vector.broadcast %15 : vector<2x1x32xf32> to vector<2x8x32xf32>
    %17 = arith.mulf %11, %16 : vector<2x8x32xf32>
    %cst_10 = arith.constant dense<0.000000e+00> : vector<2x8xf32>
    %18 = vector.multi_reduction <add>, %17, %cst_10 [2] : vector<2x8x32xf32> to vector<2x8xf32>
    %19 = vector.shape_cast %14 : vector<2x32xf32> to vector<2x1x32xf32>
    %20 = vector.broadcast %19 : vector<2x1x32xf32> to vector<2x8x32xf32>
    %21 = arith.mulf %12, %20 : vector<2x8x32xf32>
    %cst_11 = arith.constant dense<0.000000e+00> : vector<2x8xf32>
    %22 = vector.multi_reduction <add>, %21, %cst_11 [2] : vector<2x8x32xf32> to vector<2x8xf32>
    %cst_12 = arith.constant 5.000000e-01 : f32
    %23 = vector.broadcast %cst_12 : f32 to vector<2x8xf32>
    %24 = arith.cmpf ogt, %2, %23 : vector<2x8xf32>
    %cst_13 = arith.constant -1.000000e+30 : f32
    %25 = vector.broadcast %cst_13 : f32 to vector<2x8xf32>
    %26 = arith.select %24, %25, %18 : vector<2x8xi1>, vector<2x8xf32>
    %cst_14 = arith.constant dense<0xFF800000> : vector<2xf32>
    %27 = vector.multi_reduction <maximumf>, %26, %cst_14 [1] : vector<2x8xf32> to vector<2xf32>
    %28 = vector.shape_cast %27 : vector<2xf32> to vector<2x1xf32>
    %29 = vector.broadcast %28 : vector<2x1xf32> to vector<2x8xf32>
    %30 = arith.subf %26, %29 : vector<2x8xf32>
    %31 = math.exp %30 : vector<2x8xf32>
    %cst_15 = arith.constant dense<0.000000e+00> : vector<2xf32>
    %32 = vector.multi_reduction <add>, %31, %cst_15 [1] : vector<2x8xf32> to vector<2xf32>
    %33 = vector.shape_cast %32 : vector<2xf32> to vector<2x1xf32>
    %34 = vector.broadcast %33 : vector<2x1xf32> to vector<2x8xf32>
    %35 = arith.divf %31, %34 : vector<2x8xf32>
    %cst_16 = arith.constant 5.000000e-01 : f32
    %36 = vector.broadcast %cst_16 : f32 to vector<2x8xf32>
    %37 = arith.cmpf ogt, %2, %36 : vector<2x8xf32>
    %cst_17 = arith.constant -1.000000e+30 : f32
    %38 = vector.broadcast %cst_17 : f32 to vector<2x8xf32>
    %39 = arith.select %37, %38, %22 : vector<2x8xi1>, vector<2x8xf32>
    %cst_18 = arith.constant dense<0xFF800000> : vector<2xf32>
    %40 = vector.multi_reduction <maximumf>, %39, %cst_18 [1] : vector<2x8xf32> to vector<2xf32>
    %41 = vector.shape_cast %40 : vector<2xf32> to vector<2x1xf32>
    %42 = vector.broadcast %41 : vector<2x1xf32> to vector<2x8xf32>
    %43 = arith.subf %39, %42 : vector<2x8xf32>
    %44 = math.exp %43 : vector<2x8xf32>
    %cst_19 = arith.constant dense<0.000000e+00> : vector<2xf32>
    %45 = vector.multi_reduction <add>, %44, %cst_19 [1] : vector<2x8xf32> to vector<2xf32>
    %46 = vector.shape_cast %45 : vector<2xf32> to vector<2x1xf32>
    %47 = vector.broadcast %46 : vector<2x1xf32> to vector<2x8xf32>
    %48 = arith.divf %44, %47 : vector<2x8xf32>
    %49 = vector.shape_cast %35 : vector<2x8xf32> to vector<2x8x1xf32>
    %50 = vector.broadcast %49 : vector<2x8x1xf32> to vector<2x8x32xf32>
    %51 = arith.mulf %50, %0 : vector<2x8x32xf32>
    %cst_20 = arith.constant dense<0.000000e+00> : vector<2x32xf32>
    %52 = vector.multi_reduction <add>, %51, %cst_20 [1] : vector<2x8x32xf32> to vector<2x32xf32>
    %53 = vector.shape_cast %48 : vector<2x8xf32> to vector<2x8x1xf32>
    %54 = vector.broadcast %53 : vector<2x8x1xf32> to vector<2x8x32xf32>
    %55 = arith.mulf %54, %0 : vector<2x8x32xf32>
    %cst_21 = arith.constant dense<0.000000e+00> : vector<2x32xf32>
    %56 = vector.multi_reduction <add>, %55, %cst_21 [1] : vector<2x8x32xf32> to vector<2x32xf32>
    %57 = tpu.concatenate %52, %56 in 1 : vector<2x32xf32>, vector<2x32xf32> -> vector<2x64xf32>
    %c0_22 = arith.constant 0 : index
    %c0_23 = arith.constant 0 : index
    %58 = vector.load %arg5[%c0_22, %c0_23] : memref<2x64xf32, #tpu.memory_space<vmem>>, vector<2x64xf32>
    tpu.vector_store %arg5[%c0_22, %c0_23], %57 {strides = array<i32>} : memref<2x64xf32, #tpu.memory_space<vmem>>, vector<2x64xf32>,
    return
  }
}

</mosaic_0001>

<llo_original>
// kernel: tpu_custom_call.1
$region0: #{tpu_custom_call.1}
  #allocation0 [shape = 'u32[]', space=smem, size = 0x4, offset = 0x4, fixed_abs, tag = 'smem constant byte address 0x4 - core index']
  #allocation1 [shape = 'u32[144,128]{1,0:T(1,128)}', space=vmem, size = 0x12000, scoped, tag = 'internal scratch']
  %s0 = inlined_call_operand.hbm [shape: f32[2,8,32], index: 0, kind: input, shape index: {}]
  %s1 = inlined_call_operand.vmem [shape: f32[2,64], index: 1, kind: input, shape index: {}]
  %s2 = inlined_call_operand.vmem [shape: f32[2,8], index: 2, kind: input, shape index: {}]
  %s3 = inlined_call_operand.hbm [shape: f32[32,64], index: 3, kind: input, shape index: {}]
  %s4 = inlined_call_operand.vmem [shape: f32[1,64], index: 4, kind: input, shape index: {}]
  %s5 = inlined_call_operand.hbm [shape: f32[2,64], index: 5, kind: output, shape index: {}]
  %s6 = sld [smem:[#allocation0]]
  $region38: #{tpu_custom_call.1} parent=0
    _
  %s8 = ssub.s32 1, %s6
  %s9 = scalar_select 0, %s8, %s6
  $region1: #{tpu_custom_call.1} parent=0
    #allocation2 [shape = 'u8[8192]{0}', space=vmem, size = 0x2000, scoped, tag = 'input window, operand 0, single buffered']
    #allocation3 [shape = 's32[1]{0}', space=sflag, size = 0x4, scoped, tag = 'scoped memory for tpu_custom_call.1']
    #allocation4 [shape = 's32[1]{0}', space=sflag, size = 0x4, scoped, tag = 'scoped memory for tpu_custom_call.1']
    #allocation5 [shape = 'u8[16384]{0}', space=vmem, size = 0x4000, scoped, tag = 'input window, operand 3, single buffered']
    #allocation6 [shape = 's32[1]{0}', space=sflag, size = 0x4, scoped, tag = 'scoped memory for tpu_custom_call.1']
    #allocation7 [shape = 'u8[1024]{0}', space=vmem, size = 0x400, scoped, tag = 'output window, operand 0, single buffered']
    %10 = vsyncpa [#allocation3], 0
    %11 = vsyncpa [#allocation6], 0
    %12 = vsyncpa [#allocation4], 0
    // Predicated region
    $region2: #{tpu_custom_call.1} parent=1 // pred_check
      _
    $region3: #{tpu_custom_call.1} parent=1 // pred_check_branch
      %14 = sbr.rel (0) target = $region5
    $region4: #{tpu_custom_call.1} parent=1 // pred_region
      %s16 = ssub.s32 256, 256
      %17 = vsyncadd [#allocation3], %s16
      %s18 = sshll.u32 [#allocation2], 4
      %s19 = int_to_ptr.vmem [resolvable:$true] %s18
      %24 = dma.hbm_to_vmem [thread:$0]  %s0, 256, %s19, [#allocation3], 128, 128, 8
    $region5: #{tpu_custom_call.1} parent=1 // pred_fallthru
      _
    // Predicated region
    $region6: #{tpu_custom_call.1} parent=1 // pred_check
      _
    $region7: #{tpu_custom_call.1} parent=1 // pred_check_branch
      %26 = sbr.rel (0) target = $region9
    $region8: #{tpu_custom_call.1} parent=1 // pred_region
      _
    $region9: #{tpu_custom_call.1} parent=1 // pred_fallthru
      _
    // Predicated region
    $region10: #{tpu_custom_call.1} parent=1 // pred_check
      _
    $region11: #{tpu_custom_call.1} parent=1 // pred_check_branch
      %28 = sbr.rel (0) target = $region13
    $region12: #{tpu_custom_call.1} parent=1 // pred_region
      _
    $region13: #{tpu_custom_call.1} parent=1 // pred_fallthru
      _
    // Predicated region
    $region14: #{tpu_custom_call.1} parent=1 // pred_check
      _
    $region15: #{tpu_custom_call.1} parent=1 // pred_check_branch
      %30 = sbr.rel (0) target = $region17
    $region16: #{tpu_custom_call.1} parent=1 // pred_region
      %s32 = ssub.s32 512, 512
      %33 = vsyncadd [#allocation6], %s32
      %s34 = sshll.u32 [#allocation5], 4
      %s35 = int_to_ptr.vmem [resolvable:$true] %s34
      %40 = dma.hbm_to_vmem [thread:$0]  %s3, 512, %s35, [#allocation6], 128, 128, 8
    $region17: #{tpu_custom_call.1} parent=1 // pred_fallthru
      _
    // Predicated region
    $region18: #{tpu_custom_call.1} parent=1 // pred_check
      _
    $region19: #{tpu_custom_call.1} parent=1 // pred_check_branch
      %42 = sbr.rel (0) target = $region21
    $region20: #{tpu_custom_call.1} parent=1 // pred_region
      _
    $region21: #{tpu_custom_call.1} parent=1 // pred_fallthru
      _
    // Predicated region
    $region22: #{tpu_custom_call.1} parent=1 // pred_check
      _
    $region23: #{tpu_custom_call.1} parent=1 // pred_check_branch
      %44 = sbr.rel (0) target = $region25
    $region24: #{tpu_custom_call.1} parent=1 // pred_region
      %45 = dma.done [#allocation3], 256
    $region25: #{tpu_custom_call.1} parent=1 // pred_fallthru
      _
    // Predicated region
    $region26: #{tpu_custom_call.1} parent=1 // pred_check
      _
    $region27: #{tpu_custom_call.1} parent=1 // pred_check_branch
      %47 = sbr.rel (0) target = $region29
    $region28: #{tpu_custom_call.1} parent=1 // pred_region
      %48 = dma.done [#allocation6], 512
    $region29: #{tpu_custom_call.1} parent=1 // pred_fallthru
      _
    %v49 = vld [vmem:[#allocation2] sm:$0xff]
    %v50 = vld [vmem:[#allocation2 + $0x8] sm:$0xff]
    %v51 = vld [vmem:[%s1] sm:$0x3]
    %v52 = vld [vmem:[%s2] sm:$0x3]
    %v53 = vld [vmem:[#allocation5] sm:$0xff]
    %v54 = vld [vmem:[#allocation5 + $0x8] sm:$0xff]
    %v55 = vld [vmem:[#allocation5 + $0x10] sm:$0xff]
    %v56 = vld [vmem:[#allocation5 + $0x18] sm:$0xff]
    %v57 = vld [vmem:[%s4] sm:$0x1]
    %v59 = vlaneseq
    %v60 = vshrl.u32 %v59, 7
    %v61 = vsub.s32 0, %v60
    %v62 = vrot.slane %v57, %v61
    %vm64 = vcmask 261120
    %v66 = vsel %vm64, %v49, 0
    %v69 = vsel %vm64, %v50, 0
    %71 = vmatprep.subr.mxu0 0.0
    %72 = vmatpush1.msra.mxu0 %v53
    %73 = vmatprep.subr.mxu0 0.0
    %74 = vmatpush1.msra.mxu0 %v54
    %75 = vmatprep.subr.mxu0 0.0
    %76 = vmatpush1.msra.mxu0 %v55
    %77 = vmatprep.subr.mxu0 0.0
    %78 = vmatpush1.msra.mxu0 %v56
    %79 = vmatprep.subr.mxu0 0.0
    %80 = vmatpush1.msra.mxu0 0.0
    %81 = vmatprep.subr.mxu0 0.0
    %82 = vmatpush1.msra.mxu0 0.0
    %83 = vmatprep.subr.mxu0 0.0
    %84 = vmatpush1.msra.mxu0 0.0
    %85 = vmatprep.subr.mxu0 0.0
    %86 = vmatpush1.msra.mxu0 0.0
    %87 = vmatprep.subr.mxu0 0.0
    %88 = vmatpush1.msra.mxu0 0.0
    %89 = vmatprep.subr.mxu0 0.0
    %90 = vmatpush1.msra.mxu0 0.0
    %91 = vmatprep.subr.mxu0 0.0
    %92 = vmatpush1.msra.mxu0 0.0
    %93 = vmatprep.subr.mxu0 0.0
    %94 = vmatpush1.msra.mxu0 0.0
    %95 = vmatprep.subr.mxu0 0.0
    %96 = vmatpush1.msra.mxu0 0.0
    %97 = vmatprep.subr.mxu0 0.0
    %98 = vmatpush1.msra.mxu0 0.0
    %99 = vmatprep.subr.mxu0 0.0
    %100 = vmatpush1.msra.mxu0 0.0
    %101 = vmatprep.subr.mxu0 0.0
    %102 = vmatpush1.msra.mxu0 0.0
    %103 = vmatprep.subr.mxu0 0.0
    %104 = vmatpush1.msra.mxu0 0.0
    %105 = vmatprep.subr.mxu0 0.0
    %106 = vmatpush1.msra.mxu0 0.0
    %107 = vmatprep.subr.mxu0 0.0
    %108 = vmatpush1.msra.mxu0 0.0
    %109 = vmatprep.subr.mxu0 0.0
    %110 = vmatpush1.msra.mxu0 0.0
    %111 = vmatprep.subr.mxu0 0.0
    %112 = vmatpush1.msra.mxu0 0.0
    %113 = vmatprep.subr.mxu0 0.0
    %114 = vmatpush1.msra.mxu0 0.0
    %115 = vmatprep.subr.mxu0 0.0
    %116 = vmatpush1.msra.mxu0 0.0
    %117 = vmatprep.subr.mxu0 0.0
    %118 = vmatpush1.msra.mxu0 0.0
    %119 = vmatprep.subr.mxu0 0.0
    %120 = vmatpush1.msra.mxu0 0.0
    %121 = vmatprep.subr.mxu0 0.0
    %122 = vmatpush1.msra.mxu0 0.0
    %123 = vmatprep.subr.mxu0 0.0
    %124 = vmatpush1.msra.mxu0 0.0
    %125 = vmatprep.subr.mxu0 0.0
    %126 = vmatpush1.msra.mxu0 0.0
    %127 = vmatprep.subr.mxu0 0.0
    %128 = vmatpush1.msra.mxu0 0.0
    %129 = vmatprep.subr.mxu0 0.0
    %130 = vmatpush1.msra.mxu0 0.0
    %131 = vmatprep.subr.mxu0 0.0
    %132 = vmatpush1.msra.mxu0 0.0
    %133 = vmatprep.subr.mxu0 0.0
    %134 = vmatpush1.msra.mxu0 0.0
    %135 = vmatprep.mubr.f32.mxu0 0.0
    %136 = vmatmul.mubr.f32.gmra.mrb[0].mxu0 %v66
    %v137 = vpop.f32.mrb[0].mxu0
    %v138 = vadd.f32 %v62, %v137
    %v139 = vpop.f32.mrb[0].mxu0
    %140 = vmatprep.mubr.f32.mxu0 0.0
    %141 = vmatmul.mubr.f32.gmra.mrb[0].mxu0 %v69
    %v142 = vpop.f32.mrb[0].mxu0
    %v143 = vadd.f32 %v62, %v142
    %v144 = vpop.f32.mrb[0].mxu0
    %145 = vdwg.mxu0
    %v146 = vtanh.pop %v138
    %v147 = vtanh.pop %v143
    %v150 = vunpack.c.l.s4 1966171168
    %v151 = vunpack.c.0.s8 %v150
    %v152 = vlaneseq
    %v153 = vshrl.u32 %v152, 7
    %v154 = vsub.s32 %v151, %v153
    %v155 = vrot.slane %v51, %v154
    %v156 = vcombine.high %v155, %v155
    %v158 = vunpack.c.l.s4 1966171168
    %v159 = vunpack.c.0.s8 %v158
    %v160 = vlaneseq
    %v161 = vshrl.u32 %v160, 7
    %v162 = vsub.s32 %v159, %v161
    %v163 = vrot.slane %v155, %v162
    %v165 = vunpack.c.l.s4 1966171168
    %v166 = vunpack.c.0.s8 %v165
    %v167 = vlaneseq
    %v168 = vshrl.u32 %v167, 7
    %v169 = vsub.s32 %v166, %v168
    %v170 = vrot.slane %v156, %v169
    %v171 = vlaneseq
    %v172 = vshrl.u32 %v171, 7
    %v173 = vsub.s32 0, %v172
    %v174 = vrot.slane %v163, %v173
    %v175 = vlaneseq
    %v176 = vshrl.u32 %v175, 7
    %v177 = vsub.s32 0, %v176
    %v178 = vrot.slane %v170, %v177
    %v181 = vmul.f32 %v146, %v174
    %v182 = vmul.f32 %v147, %v178
    %v183 = vsel %vm64, %v181, 0.0
    %184 = vadd.xlane.f32.xlu0 %v183
    %v185 = vpop.xlane.xlu0 %184
    %v186 = vsel %vm64, %v182, 0.0
    %187 = vadd.xlane.f32.xlu0 %v186
    %v188 = vpop.xlane.xlu0 %187
    %191 = vrot.lane.b32.xlu0 %v181, 96
    %v192 = vpop.permute.xlu0 %191
    %193 = vrot.lane.b32.xlu0 %v182, 96
    %v194 = vpop.permute.xlu0 %193
    %v197 = vsel %vm64, %v192, 0.0
    %198 = vadd.xlane.f32.xlu0 %v197
    %v199 = vpop.xlane.xlu0 %198
    %v200 = vsel %vm64, %v194, 0.0
    %201 = vadd.xlane.f32.xlu0 %v200
    %v202 = vpop.xlane.xlu0 %201
    %vm203 = vcmp.gt.f32.partialorder %v52, 0.5
    %v206 = vlaneseq
    %v207 = vand.u32 %v206, 127
    %v208 = vlaneseq
    %v209 = vshrl.u32 %v208, 7
    %v210 = vsub.s32 %v207, %v209
    %v211 = vrot.slane %v185, %v210
    %v212 = vlaneseq
    %v213 = vshrl.u32 %v212, 7
    %v214 = vsub.s32 %v207, %v213
    %v215 = vrot.slane %v188, %v214
    %vm216 = vcmask 1041409
    %v217 = vsel %vm216, %v215, %v211
    %v219 = vsel %vm203, -1e+30, %v217
    %vm220 = vcmask 58368
    %v221 = vsel %vm220, %v219, -inf
    %222 = vmax.xlane.f32.xlu0 %v221
    %v223 = vpop.xlane.xlu0 %222
    %v224 = vsub.f32 %v219, %v223
    %v225 = vmul.f32 %v224, 1.442695
    %v226 = vpow.pop %v225
    %v227 = vsel %vm220, %v226, 0.0
    %228 = vadd.xlane.f32.xlu0 %v227
    %v229 = vpop.xlane.xlu0 %228
    %v230 = vrcp.pop %v229
    %v231 = vmul.f32 %v226, %v230
    %v234 = vlaneseq
    %v235 = vshrl.u32 %v234, 7
    %v236 = vsub.s32 %v207, %v235
    %v237 = vrot.slane %v199, %v236
    %v238 = vlaneseq
    %v239 = vshrl.u32 %v238, 7
    %v240 = vsub.s32 %v207, %v239
    %v241 = vrot.slane %v202, %v240
    %v242 = vsel %vm216, %v241, %v237
    %v244 = vsel %vm203, -1e+30, %v242
    %v245 = vsel %vm220, %v244, -inf
    %246 = vmax.xlane.f32.xlu0 %v245
    %v247 = vpop.xlane.xlu0 %246
    %v248 = vsub.f32 %v244, %v247
    %v249 = vmul.f32 %v248, 1.442695
    %v250 = vpow.pop %v249
    %v251 = vsel %vm220, %v250, 0.0
    %252 = vadd.xlane.f32.xlu0 %v251
    %v253 = vpop.xlane.xlu0 %252
    %v254 = vrcp.pop %v253
    %v255 = vmul.f32 %v250, %v254
    %v256 = vlaneseq
    %v257 = vshrl.u32 %v256, 7
    %v258 = vsub.s32 0, %v257
    %v259 = vrot.slane %v231, %v258
    %261 = vbcast.lane.b32.xlu0 %v259, 256
    %v262 = vpop.permute.xlu0 %261
    %v263 = vlaneseq
    %v264 = vshrl.u32 %v263, 7
    %v265 = vsub.s32 1, %v264
    %v266 = vrot.slane %v231, %v265
    %268 = vbcast.lane.b32.xlu0 %v266, 256
    %v269 = vpop.permute.xlu0 %268
    %v270 = vmul.f32 %v262, %v49
    %v271 = vmul.f32 %v269, %v50
    %v272 = vsel %vm64, %v270, 0.0
    %v273 = vrot.slane %v272, 4
    %v274 = vadd.f32 %v272, %v273
    %v275 = vrot.slane %v274, 2
    %v276 = vadd.f32 %v274, %v275
    %v277 = vrot.slane %v276, 1
    %v278 = vadd.f32 %v276, %v277
    %v279 = vsel %vm64, %v271, 0.0
    %v280 = vrot.slane %v279, 4
    %v281 = vadd.f32 %v279, %v280
    %v282 = vrot.slane %v281, 2
    %v283 = vadd.f32 %v281, %v282
    %v284 = vrot.slane %v283, 1
    %v285 = vadd.f32 %v283, %v284
    %v286 = vlaneseq
    %v287 = vshrl.u32 %v286, 7
    %v288 = vsub.s32 0, %v287
    %v289 = vrot.slane %v255, %v288
    %291 = vbcast.lane.b32.xlu0 %v289, 256
    %v292 = vpop.permute.xlu0 %291
    %v293 = vlaneseq
    %v294 = vshrl.u32 %v293, 7
    %v295 = vsub.s32 1, %v294
    %v296 = vrot.slane %v255, %v295
    %298 = vbcast.lane.b32.xlu0 %v296, 256
    %v299 = vpop.permute.xlu0 %298
    %v300 = vmul.f32 %v292, %v49
    %v301 = vmul.f32 %v299, %v50
    %v302 = vsel %vm64, %v300, 0.0
    %v303 = vrot.slane %v302, 4
    %v304 = vadd.f32 %v302, %v303
    %v305 = vrot.slane %v304, 2
    %v306 = vadd.f32 %v304, %v305
    %v307 = vrot.slane %v306, 1
    %v308 = vadd.f32 %v306, %v307
    %v309 = vsel %vm64, %v301, 0.0
    %v310 = vrot.slane %v309, 4
    %v311 = vadd.f32 %v309, %v310
    %v312 = vrot.slane %v311, 2
    %v313 = vadd.f32 %v311, %v312
    %v314 = vrot.slane %v313, 1
    %v315 = vadd.f32 %v313, %v314
    %v318 = vsel %vm216, %v285, %v278
    %v322 = vsel %vm216, %v315, %v308
    %323 = vrot.lane.b32.xlu0 %v322, 32
    %v324 = vpop.permute.xlu0 %323
    %v326 = vsel %vm64, %v318, %v324
    %vm327 = vcmask 517120
    %328 = vst.msk [vmem:[#allocation7] sm:$0x3] %vm327, %v326
    // Predicated region
    $region30: #{tpu_custom_call.1} parent=1 // pred_check
      _
    $region31: #{tpu_custom_call.1} parent=1 // pred_check_branch
      %330 = sbr.rel (0) target = $region33
    $region32: #{tpu_custom_call.1} parent=1 // pred_region
      %s332 = ssub.s32 32, 32
      %333 = vsyncadd [#allocation4], %s332
      %s335 = sshll.u32 [#allocation7], 4
      %s336 = int_to_ptr.vmem [resolvable:$true] %s335
      %338 = dma.vmem_to_hbm [thread:$0]  %s336, 32, %s5, [#allocation4]
    $region33: #{tpu_custom_call.1} parent=1 // pred_fallthru
      _
    // Predicated region
    $region34: #{tpu_custom_call.1} parent=1 // pred_check
      _
    $region35: #{tpu_custom_call.1} parent=1 // pred_check_branch
      %340 = sbr.rel (0) target = $region37
    $region36: #{tpu_custom_call.1} parent=1 // pred_region
      %341 = dma.done [#allocation4], 32
    $region37: #{tpu_custom_call.1} parent=1 // pred_fallthru
      _
    %342 = vsyncpa [#allocation3], 1
    %343 = vsyncpa [#allocation6], 1
    %344 = vsyncpa [#allocation4], 1

</llo_original>
